<compile_context>
chip_gen: v6e
topology: v6e:2x2x1
jax: 0.10.0
libtpu: 0.0.40
codegen_flags: <defaults>
</compile_context>

<pallas_src>
import functools

import jax
import jax.numpy as jnp
from jax.experimental import pallas as pl
from jax.experimental.pallas import tpu as pltpu

_LANES = 128
_DELTA = 1.0          # torch.nn.HuberLoss default delta
_ACC_ROWS = 512       # rows kept in the resident accumulator (fold target)


def _num_tensorcores():
    """Best-effort TensorCores-per-JAX-device count (megacore chips => 2)."""
    try:
        kind = jax.devices()[0].device_kind.lower()
    except Exception:
        return 1
    # Single-TC per device: v2/v3 (one device per core) and the e-/lite series.
    if any(tag in kind for tag in ("v2", "v3", "lite", "v5e", "v6e")):
        return 1
    # v4 / v5p / v7x expose one device per chip with 2 TensorCores.
    return 2


def _huber_elementwise(pred_f32, tgt_f32):
    # Branch-free Huber (delta = 1.0): c = clamp(d, -d, d); c*d - 0.5*c*c
    d = pred_f32 - tgt_f32
    c = jnp.clip(d, -_DELTA, _DELTA)
    return c * d - 0.5 * c * c


def _huber_kernel(pred_ref, tgt_ref, acc_ref, *, rows_full, t_rows, steps,
                  fold, acc_rows, needs_edge):
    """Accumulate per-element Huber loss into a small resident f32 block."""
    p = pl.program_id(0)   # parallel slice (maps to TensorCores on dual-TC chips)
    i = pl.program_id(1)   # sequential reduction axis

    @pl.when(i == 0)
    def _():
        acc_ref[...] = jnp.zeros_like(acc_ref)

    # Cast-on-load keeps HBM traffic at the input dtype width.
    per = _huber_elementwise(pred_ref[...].astype(jnp.float32),
                             tgt_ref[...].astype(jnp.float32))

    def fold_sum(x):
        # Major-axis fold: layout-preserving reshape + pure-VPU adds (no XLU).
        if fold > 1:
            return x.reshape(fold, acc_rows, _LANES).sum(axis=0)
        return x

    if needs_edge:
        tile_idx = p * steps + i            # unclamped logical tile index
        tile_start = tile_idx * t_rows      # row offset (small, no i32 overflow)
        is_edge = tile_start + t_rows > rows_full

        # Fast path: interior tiles are fully valid -> no mask work at all.
        @pl.when(jnp.logical_not(is_edge))
        def _():
            acc_ref[...] += fold_sum(per)

        # Edge path: partial last tile and/or clamped duplicate tile.
        @pl.when(is_edge)
        def _():
            r = jax.lax.broadcasted_iota(jnp.int32, (t_rows, _LANES), 0)
            valid = (tile_start + r) < rows_full
            acc_ref[...] += fold_sum(jnp.where(valid, per, 0.0))
    else:
        acc_ref[...] += fold_sum(per)       # mask-free steady state


def huber_loss(output, target, *, tile_rows=4096):
    """Mean Huber loss (delta=1.0) of two same-shaped arrays via a Pallas TPU kernel."""
    assert output.shape == target.shape, "output/target must match"
    assert tile_rows % 8 == 0, "tile_rows must be a multiple of 8 (sublane tiling)"
    n_true = int(output.size)
    assert n_true > 0, "HuberLoss of empty tensors is undefined"

    pred_flat = jnp.ravel(output)
    tgt_flat = jnp.ravel(target)

    rows_full = n_true // _LANES
    n_bulk = rows_full * _LANES
    tail = n_true - n_bulk

    total = jnp.zeros((), jnp.float32)

    if rows_full > 0:
        # Aligned bulk only; no full-array pad.  Aligned case: pure reshape.
        pred2d = (pred_flat if tail == 0 else pred_flat[:n_bulk]).reshape(rows_full, _LANES)
        tgt2d = (tgt_flat if tail == 0 else tgt_flat[:n_bulk]).reshape(rows_full, _LANES)

        t_rows = tile_rows if rows_full >= tile_rows else rows_full
        total_tiles = pl.cdiv(rows_full, t_rows)
        n_par = _num_tensorcores() if total_tiles >= 2 else 1
        steps = pl.cdiv(total_tiles, n_par)

        clamp_needed = (n_par * steps != total_tiles)      # over-coverage step
        partial_tail = (total_tiles * t_rows != rows_full)  # last tile partially OOB
        needs_edge = clamp_needed or partial_tail

        last_tile = total_tiles - 1
        if clamp_needed:
            def in_index(p, i):
                # Keep the block window in bounds; masked to zero contribution.
                return (jnp.minimum(p * steps + i, last_tile), 0)
        else:
            def in_index(p, i):
                return (p * steps + i, 0)

        # Small resident accumulator decoupled from the streaming block size.
        if t_rows % _ACC_ROWS == 0 and t_rows > _ACC_ROWS:
            acc_rows, fold = _ACC_ROWS, t_rows // _ACC_ROWS
        else:
            acc_rows, fold = t_rows, 1

        kernel = functools.partial(
            _huber_kernel,
            rows_full=rows_full,
            t_rows=t_rows,
            steps=steps,
            fold=fold,
            acc_rows=acc_rows,
            needs_edge=needs_edge,
        )

        partials = pl.pallas_call(
            kernel,
            out_shape=jax.ShapeDtypeStruct((n_par, acc_rows, _LANES), jnp.float32),
            grid=(n_par, steps),
            in_specs=[
                pl.BlockSpec((t_rows, _LANES), in_index),
                pl.BlockSpec((t_rows, _LANES), in_index),
            ],
            # Same block across the reduction axis -> resident accumulator;
            # one small block per parallel slice.
            out_specs=pl.BlockSpec((None, acc_rows, _LANES), lambda p, i: (p, 0, 0)),
            compiler_params=pltpu.CompilerParams(
                dimension_semantics=("parallel", "arbitrary"),
                vmem_limit_bytes=32 * 1024 * 1024,
            ),
        )(pred2d, tgt2d)

        total = total + jnp.sum(partials)

    if tail > 0:
        # <128-element ragged tail: trivial plain-JAX path (no full-array pad/copy).
        total = total + jnp.sum(
            _huber_elementwise(pred_flat[n_bulk:].astype(jnp.float32),
                               tgt_flat[n_bulk:].astype(jnp.float32)))

    return total / n_true


def _huber_ref(output, target):
    d = output.astype(jnp.float32) - target.astype(jnp.float32)
    ad = jnp.abs(d)
    per = jnp.where(ad < _DELTA, 0.5 * d * d, _DELTA * (ad - 0.5 * _DELTA))
    return jnp.mean(per)


if __name__ == "__main__":
    key = jax.random.PRNGKey(0)

    # Main case: small Q-network-like output/target pair (lane-aligned, single tile).
    k1, k2 = jax.random.split(key)
    output = jax.random.normal(k1, (2, 4, 16, 16), dtype=jnp.float32) * 2.0
    target = jax.random.normal(k2, (2, 4, 16, 16), dtype=jnp.float32) * 2.0
    loss = huber_loss(output, target)
    jax.block_until_ready(loss)
    ref = _huber_ref(output, target)
    assert jnp.allclose(loss, ref, rtol=1e-5, atol=1e-5), (loss, ref)

    # Non-lane-aligned element count: exercises the plain-JAX tail path.
    k3, k4 = jax.random.split(k1)
    out_b = jax.random.normal(k3, (2, 3, 15, 17), dtype=jnp.float32)
    tgt_b = jax.random.normal(k4, (2, 3, 15, 17), dtype=jnp.float32)
    loss_b = huber_loss(out_b, tgt_b)
    jax.block_until_ready(loss_b)
    ref_b = _huber_ref(out_b, tgt_b)
    assert jnp.allclose(loss_b, ref_b, rtol=1e-5, atol=1e-5), (loss_b, ref_b)

    # Multi-tile with partial last tile (and clamped step on dual-TC chips):
    # exercises the per-step-gated edge mask.
    k5, k6 = jax.random.split(k2)
    out_c = jax.random.normal(k5, (2, 4, 16, 20), dtype=jnp.float32)
    tgt_c = jax.random.normal(k6, (2, 4, 16, 20), dtype=jnp.float32)
    loss_c = huber_loss(out_c, tgt_c, tile_rows=8)
    jax.block_until_ready(loss_c)
    ref_c = _huber_ref(out_c, tgt_c)
    assert jnp.allclose(loss_c, ref_c, rtol=1e-5, atol=1e-5), (loss_c, ref_c)

    # Larger aligned case: exercises the major-axis fold into the small
    # (512, 128) resident accumulator (single-tile and multi-tile variants).
    k7, k8 = jax.random.split(k3)
    out_d = jax.random.normal(k7, (2, 4, 128, 256), dtype=jnp.float32)
    tgt_d = jax.random.normal(k8, (2, 4, 128, 256), dtype=jnp.float32)
    loss_d = huber_loss(out_d, tgt_d)                     # single tile, fold=4
    loss_d2 = huber_loss(out_d, tgt_d, tile_rows=1024)    # multi-tile, fold=2
    jax.block_until_ready(loss_d)
    jax.block_until_ready(loss_d2)
    ref_d = _huber_ref(out_d, tgt_d)
    assert jnp.allclose(loss_d, ref_d, rtol=1e-5, atol=1e-5), (loss_d, ref_d)
    assert jnp.allclose(loss_d2, ref_d, rtol=1e-5, atol=1e-5), (loss_d2, ref_d)

    print("KERNEL_OK")
</pallas_src>

<mosaic_0001>
module attributes {stable_mosaic.version = 11 : i64} {
  func.func @_huber_kernel(%arg0: i32, %arg1: i32, %arg2: memref<16x128xf32, #tpu.memory_space<vmem>>, %arg3: memref<16x128xf32, #tpu.memory_space<vmem>>, %arg4: memref<1x16x128xf32, #tpu.memory_space<vmem>>) attributes {dimension_semantics = [#tpu.dimension_semantics<parallel>, #tpu.dimension_semantics<arbitrary>], iteration_bounds = array<i64: 1, 1>, scalar_prefetch = 0 : i64, scratch_operands = 0 : i64, tpu.core_type = #tpu.core_type<tc>, window_params = [{transform_indices = @transform_0, window_bounds = array<i64: 16, 128>}, {transform_indices = @transform_1, window_bounds = array<i64: 16, 128>}, {transform_indices = @transform_2, window_bounds = array<i64: 1, 16, 128>}]} {
    %c0_i32 = arith.constant 0 : i32
    %0 = arith.cmpi eq, %arg1, %c0_i32 : i32
    %1 = arith.extui %0 : i1 to i32
    %c0_i32_0 = arith.constant 0 : i32
    %2 = arith.cmpi ne, %1, %c0_i32_0 : i32
    scf.if %2 {
      %cst_12 = arith.constant 0.000000e+00 : f32
      %21 = vector.broadcast %cst_12 : f32 to vector<16x128xf32>
      %c0_13 = arith.constant 0 : index
      %c0_14 = arith.constant 0 : index
      %c0_15 = arith.constant 0 : index
      %22 = vector.load %arg4[%c0_13, %c0_14, %c0_15] : memref<1x16x128xf32, #tpu.memory_space<vmem>>, vector<1x16x128xf32>
      %23 = vector.shape_cast %22 : vector<1x16x128xf32> to vector<16x128xf32>
      %24 = vector.shape_cast %21 : vector<16x128xf32> to vector<1x16x128xf32>
      tpu.vector_store %arg4[%c0_13, %c0_14, %c0_15], %24 {strides = array<i32>} : memref<1x16x128xf32, #tpu.memory_space<vmem>>, vector<1x16x128xf32>,
    } else {
    }
    %c0 = arith.constant 0 : index
    %c0_1 = arith.constant 0 : index
    %3 = vector.load %arg2[%c0, %c0_1] : memref<16x128xf32, #tpu.memory_space<vmem>>, vector<16x128xf32>
    %c0_2 = arith.constant 0 : index
    %c0_3 = arith.constant 0 : index
    %4 = vector.load %arg3[%c0_2, %c0_3] : memref<16x128xf32, #tpu.memory_space<vmem>>, vector<16x128xf32>
    %5 = arith.subf %3, %4 : vector<16x128xf32>
    %cst = arith.constant -1.000000e+00 : f32
    %cst_4 = arith.constant 1.000000e+00 : f32
    %6 = vector.broadcast %cst : f32 to vector<16x128xf32>
    %7 = arith.maximumf %6, %5 : vector<16x128xf32>
    %8 = vector.broadcast %cst_4 : f32 to vector<16x128xf32>
    %9 = arith.minimumf %8, %7 : vector<16x128xf32>
    %10 = arith.mulf %9, %5 : vector<16x128xf32>
    %cst_5 = arith.constant 5.000000e-01 : f32
    %11 = vector.broadcast %cst_5 : f32 to vector<16x128xf32>
    %12 = arith.mulf %11, %9 : vector<16x128xf32>
    %13 = arith.mulf %12, %9 : vector<16x128xf32>
    %14 = arith.subf %10, %13 : vector<16x128xf32>
    %c0_6 = arith.constant 0 : index
    %c0_7 = arith.constant 0 : index
    %c0_8 = arith.constant 0 : index
    %15 = vector.load %arg4[%c0_6, %c0_7, %c0_8] : memref<1x16x128xf32, #tpu.memory_space<vmem>>, vector<1x16x128xf32>
    %16 = vector.shape_cast %15 : vector<1x16x128xf32> to vector<16x128xf32>
    %17 = arith.addf %16, %14 : vector<16x128xf32>
    %c0_9 = arith.constant 0 : index
    %c0_10 = arith.constant 0 : index
    %c0_11 = arith.constant 0 : index
    %18 = vector.load %arg4[%c0_9, %c0_10, %c0_11] : memref<1x16x128xf32, #tpu.memory_space<vmem>>, vector<1x16x128xf32>
    %19 = vector.shape_cast %18 : vector<1x16x128xf32> to vector<16x128xf32>
    %20 = vector.shape_cast %17 : vector<16x128xf32> to vector<1x16x128xf32>
    tpu.vector_store %arg4[%c0_9, %c0_10, %c0_11], %20 {strides = array<i32>} : memref<1x16x128xf32, #tpu.memory_space<vmem>>, vector<1x16x128xf32>,
    return
  }
  func.func @transform_0(%arg0: i32, %arg1: i32) -> (i32, i32) {
    %c1_i32 = arith.constant 1 : i32
    %0 = arith.muli %arg0, %c1_i32 : i32
    %1 = arith.addi %0, %arg1 : i32
    %c0_i32 = arith.constant 0 : i32
    %c0_i32_0 = arith.constant 0 : i32
    return %1, %c0_i32 : i32, i32
  }
  func.func @transform_1(%arg0: i32, %arg1: i32) -> (i32, i32) {
    %c1_i32 = arith.constant 1 : i32
    %0 = arith.muli %arg0, %c1_i32 : i32
    %1 = arith.addi %0, %arg1 : i32
    %c0_i32 = arith.constant 0 : i32
    %c0_i32_0 = arith.constant 0 : i32
    return %1, %c0_i32 : i32, i32
  }
  func.func @transform_2(%arg0: i32, %arg1: i32) -> (i32, i32, i32) {
    %c0_i32 = arith.constant 0 : i32
    %c0_i32_0 = arith.constant 0 : i32
    %c0_i32_1 = arith.constant 0 : i32
    return %arg0, %c0_i32, %c0_i32_0 : i32, i32, i32
  }
}

</mosaic_0001>

<llo_original>
// kernel: tpu_custom_call.1
$region0: #{tpu_custom_call.1}
  #allocation0 [shape = 'u32[]', space=smem, size = 0x4, offset = 0x4, fixed_abs, tag = 'smem constant byte address 0x4 - core index']
  #allocation1 [shape = 'u32[144,128]{1,0:T(1,128)}', space=vmem, size = 0x12000, scoped, tag = 'internal scratch']
  %s0 = inlined_call_operand.hbm [shape: f32[16,128], index: 0, kind: input, shape index: {}]
  %s1 = inlined_call_operand.hbm [shape: f32[16,128], index: 1, kind: input, shape index: {}]
  %s2 = inlined_call_operand.hbm [shape: f32[1,16,128], index: 2, kind: output, shape index: {}]
  %s3 = sld [smem:[#allocation0]]
  $region30: #{tpu_custom_call.1} parent=0
    _
  %s5 = ssub.s32 1, %s3
  %s6 = scalar_select 0, %s5, %s3
  $region1: #{tpu_custom_call.1} parent=0
    #allocation2 [shape = 'u8[8192]{0}', space=vmem, size = 0x2000, scoped, tag = 'input window, operand 0, single buffered']
    #allocation3 [shape = 's32[1]{0}', space=sflag, size = 0x4, scoped, tag = 'scoped memory for tpu_custom_call.1']
    #allocation4 [shape = 's32[1]{0}', space=sflag, size = 0x4, scoped, tag = 'scoped memory for tpu_custom_call.1']
    #allocation5 [shape = 'u8[8192]{0}', space=vmem, size = 0x2000, scoped, tag = 'input window, operand 1, single buffered']
    #allocation6 [shape = 's32[1]{0}', space=sflag, size = 0x4, scoped, tag = 'scoped memory for tpu_custom_call.1']
    #allocation7 [shape = 'u8[8192]{0}', space=vmem, size = 0x2000, scoped, tag = 'output window, operand 0, single buffered']
    %7 = vsyncpa [#allocation3], 0
    %8 = vsyncpa [#allocation6], 0
    %9 = vsyncpa [#allocation4], 0
    // Predicated region
    $region2: #{tpu_custom_call.1} parent=1 // pred_check
      _
    $region3: #{tpu_custom_call.1} parent=1 // pred_check_branch
      %11 = sbr.rel (0) target = $region5
    $region4: #{tpu_custom_call.1} parent=1 // pred_region
      %s12 = sadd.s32 0, 0
      %s13 = smul.u32 2, %s12
      %s15 = ssub.s32 256, 256
      %16 = vsyncadd [#allocation3], %s15
      %s17 = smul.addr %s13, 128
      %s18 = scalar_lea.hbm %s0, %s17
      %s19 = sshll.u32 [#allocation2], 4
      %s20 = int_to_ptr.vmem [resolvable:$true] %s19
      %25 = dma.hbm_to_vmem [thread:$0]  %s18, 256, %s20, [#allocation3], 128, 128, 8
    $region5: #{tpu_custom_call.1} parent=1 // pred_fallthru
      _
    // Predicated region
    $region6: #{tpu_custom_call.1} parent=1 // pred_check
      _
    $region7: #{tpu_custom_call.1} parent=1 // pred_check_branch
      %27 = sbr.rel (0) target = $region9
    $region8: #{tpu_custom_call.1} parent=1 // pred_region
      %s28 = sadd.s32 0, 0
      %s29 = smul.u32 2, %s28
      %s31 = ssub.s32 256, 256
      %32 = vsyncadd [#allocation6], %s31
      %s33 = smul.addr %s29, 128
      %s34 = scalar_lea.hbm %s1, %s33
      %s35 = sshll.u32 [#allocation5], 4
      %s36 = int_to_ptr.vmem [resolvable:$true] %s35
      %41 = dma.hbm_to_vmem [thread:$0]  %s34, 256, %s36, [#allocation6], 128, 128, 8
    $region9: #{tpu_custom_call.1} parent=1 // pred_fallthru
      _
    // Predicated region
    $region10: #{tpu_custom_call.1} parent=1 // pred_check
      _
    $region11: #{tpu_custom_call.1} parent=1 // pred_check_branch
      %43 = sbr.rel (0) target = $region13
    $region12: #{tpu_custom_call.1} parent=1 // pred_region
      %44 = dma.done [#allocation3], 256
    $region13: #{tpu_custom_call.1} parent=1 // pred_fallthru
      _
    // Predicated region
    $region14: #{tpu_custom_call.1} parent=1 // pred_check
      _
    $region15: #{tpu_custom_call.1} parent=1 // pred_check_branch
      %46 = sbr.rel (0) target = $region17
    $region16: #{tpu_custom_call.1} parent=1 // pred_region
      %47 = dma.done [#allocation6], 256
    $region17: #{tpu_custom_call.1} parent=1 // pred_fallthru
      _
    %s48 = sadd.s32 0, 0
    %s49 = smul.u32 2, %s48
    %s50 = sadd.s32 0, 0
    %s51 = smul.u32 2, %s50
    %p52 = scmp.eq.s32.totalorder 0, 0
    // Predicated region
    $region18: #{tpu_custom_call.1} parent=1 // pred_check
      %p53 = pneg %p52
    $region19: #{tpu_custom_call.1} parent=1 // pred_check_branch
      %55 = sbr.rel (%p53) target = $region21
    $region20: #{tpu_custom_call.1} parent=1 // pred_region
      %56 = vst [vmem:[#allocation7] sm:$0xff] 0.0
      %57 = vst [vmem:[#allocation7 + $0x8] sm:$0xff] 0.0
    $region21: #{tpu_custom_call.1} parent=1 // pred_fallthru
      _
    %v58 = vld [vmem:[#allocation2] sm:$0xff]
    %v59 = vld [vmem:[#allocation2 + $0x8] sm:$0xff]
    %v60 = vld [vmem:[#allocation5] sm:$0xff]
    %v61 = vld [vmem:[#allocation5 + $0x8] sm:$0xff]
    %v62 = vsub.f32 %v58, %v60
    %v63 = vsub.f32 %v59, %v61
    %v64 = vmax.f32 %v62, -1.0
    %v65 = vmax.f32 %v63, -1.0
    %v66 = vmin.f32 %v64, 1.0
    %v67 = vmin.f32 %v65, 1.0
    %v68 = vmul.f32 %v66, %v62
    %v69 = vmul.f32 %v67, %v63
    %v70 = vmul.f32 %v66, 0.5
    %v71 = vmul.f32 %v67, 0.5
    %v72 = vmul.f32 %v70, %v66
    %v73 = vmul.f32 %v71, %v67
    %v74 = vsub.f32 %v68, %v72
    %v75 = vsub.f32 %v69, %v73
    %v76 = vld [vmem:[#allocation7] sm:$0xff]
    %v77 = vld [vmem:[#allocation7 + $0x8] sm:$0xff]
    %v78 = vadd.f32 %v76, %v74
    %v79 = vadd.f32 %v77, %v75
    %80 = vst [vmem:[#allocation7] sm:$0xff] %v78
    %81 = vst [vmem:[#allocation7 + $0x8] sm:$0xff] %v79
    // Predicated region
    $region22: #{tpu_custom_call.1} parent=1 // pred_check
      _
    $region23: #{tpu_custom_call.1} parent=1 // pred_check_branch
      %83 = sbr.rel (0) target = $region25
    $region24: #{tpu_custom_call.1} parent=1 // pred_region
      %s85 = ssub.s32 256, 256
      %86 = vsyncadd [#allocation4], %s85
      %s87 = sshll.u32 [#allocation7], 4
      %s88 = int_to_ptr.vmem [resolvable:$true] %s87
      %93 = dma.vmem_to_hbm [thread:$0]  %s88, 256, %s2, [#allocation4], 128, 128, 8
    $region25: #{tpu_custom_call.1} parent=1 // pred_fallthru
      _
    // Predicated region
    $region26: #{tpu_custom_call.1} parent=1 // pred_check
      _
    $region27: #{tpu_custom_call.1} parent=1 // pred_check_branch
      %95 = sbr.rel (0) target = $region29
    $region28: #{tpu_custom_call.1} parent=1 // pred_region
      %96 = dma.done [#allocation4], 256
    $region29: #{tpu_custom_call.1} parent=1 // pred_fallthru
      _
    %97 = vsyncpa [#allocation3], 1
    %98 = vsyncpa [#allocation6], 1
    %99 = vsyncpa [#allocation4], 1

</llo_original>
